<compile_context>
chip_gen: v5e
topology: v5e:2x2
jax: 0.10.0
libtpu: 0.0.40
codegen_flags: <defaults>
</compile_context>

<pallas_src>
import numpy as np
import jax
import jax.numpy as jnp
from jax import lax
from jax.experimental import pallas as pl
from jax.experimental.pallas import tpu as pltpu


def _cdiv(a, b):
    return -(-a // b)


def _round_up(a, b):
    return _cdiv(a, b) * b


# ----------------------------------------------------------------------------
# Kernel 1: waveform L1 -> per-time-block lane partial sums of |y - x|
# ----------------------------------------------------------------------------
def _make_waveform_kernel(T, t_tile, ragged):
    def kernel(x_ref, y_ref, o_ref):
        d = jnp.abs(y_ref[...].astype(jnp.float32) - x_ref[...].astype(jnp.float32))
        if ragged:   # static: only emitted when the last time block overruns T
            col = pl.program_id(0) * t_tile + lax.broadcasted_iota(jnp.int32, d.shape, 1)
            d = jnp.where(col < T, d, 0.0)
        o_ref[...] = jnp.sum(d, axis=0, keepdims=True)   # (1, t_tile) lane partials
    return kernel


def waveform_distance(x, y):
    """mean(|y - x|) over all elements.  Pad-free: operates on the free (B*C, T)
    view; each grid step writes its own lane-partial block (no accumulation)."""
    B, C, T = x.shape
    RC = B * C
    n_true = RC * T
    xf = x.reshape(RC, T)
    yf = y.reshape(RC, T)

    LANES = 128
    target_bytes = 4 << 20                                   # ~4 MiB per input block
    bytes_per_col = max(1, 4 * RC)
    max_lanes = max(LANES, (target_bytes // bytes_per_col) // LANES * LANES)
    if T <= max_lanes:
        t_tile, ragged = T, False                            # full-extent last dim
    else:
        t_tile, ragged = max_lanes, (T % max_lanes != 0)
    t_cols = _cdiv(T, t_tile)

    partial = pl.pallas_call(
        _make_waveform_kernel(T, t_tile, ragged),
        out_shape=jax.ShapeDtypeStruct((1, t_cols * t_tile), jnp.float32),
        grid=(t_cols,),
        in_specs=[
            pl.BlockSpec((RC, t_tile), lambda j: (0, j)),
            pl.BlockSpec((RC, t_tile), lambda j: (0, j)),
        ],
        out_specs=pl.BlockSpec((1, t_tile), lambda j: (0, j)),
        compiler_params=pltpu.CompilerParams(dimension_semantics=("parallel",)),
    )(xf, yf)
    return jnp.sum(partial) / jnp.float32(n_true)


# ----------------------------------------------------------------------------
# Fused windowed DFT basis: [win*cos | win*sin], bins zero-padded to x128 lanes.
# Zero columns give sx = sy = 0 and contribute nothing to any of the sums.
# ----------------------------------------------------------------------------
def _fused_windowed_basis(n_fft, nbp):
    n_bins = n_fft // 2 + 1
    n = np.arange(n_fft)
    k = np.arange(n_bins)
    ang = 2.0 * np.pi * np.outer(n, k) / n_fft
    win = 0.5 - 0.5 * np.cos(2.0 * np.pi * n / n_fft)        # periodic hann
    basis = np.zeros((n_fft, 2 * nbp), np.float32)
    basis[:, :n_bins] = win[:, None] * np.cos(ang)
    basis[:, nbp:nbp + n_bins] = win[:, None] * np.sin(ang)
    return basis


# ----------------------------------------------------------------------------
# Kernel 2: per-scale spectral distance partial sums.
# One grid step = TF frames of one signal row: a single aligned
# (TF, n_fft) x (n_fft, 2*nbp) bf16 matmul per input, f32 accumulation.
# ----------------------------------------------------------------------------
def _make_spectral_kernel(nbp, chunks_per_group):
    def kernel(fx_ref, fy_ref, w_ref, o_ref, sqd_acc, sqx_acc, alog_acc):
        c = pl.program_id(2)

        @pl.when(c == 0)
        def _():
            sqd_acc[...] = jnp.zeros_like(sqd_acc)
            sqx_acc[...] = jnp.zeros_like(sqx_acc)
            alog_acc[...] = jnp.zeros_like(alog_acc)

        res_x = jnp.dot(fx_ref[...], w_ref[...], preferred_element_type=jnp.float32)
        res_y = jnp.dot(fy_ref[...], w_ref[...], preferred_element_type=jnp.float32)

        rex, imx = res_x[:, :nbp], res_x[:, nbp:]            # lane-aligned slices
        rey, imy = res_y[:, :nbp], res_y[:, nbp:]
        px = rex * rex + imx * imx                           # power of x
        py = rey * rey + imy * imy
        sx = jnp.sqrt(px)                                    # magnitude spectrograms
        sy = jnp.sqrt(py)
        d = sx - sy

        # Element-wise (VPU/EUP-only) accumulation; XLU reduce deferred to last step.
        sqd_acc[...] += d * d
        sqx_acc[...] += px
        # log(1+x) instead of log1p: identical at these magnitudes, guaranteed lowering.
        alog_acc[...] += jnp.abs(jnp.log(1.0 + sx) - jnp.log(1.0 + sy))

        @pl.when(c == chunks_per_group - 1)
        def _():
            s0 = jnp.sum(sqd_acc[...])
            s1 = jnp.sum(sqx_acc[...])
            s2 = jnp.sum(alog_acc[...])
            lane = lax.broadcasted_iota(jnp.int32, (1, 128), 1)
            o_ref[...] = jnp.where(lane == 0, s0,
                         jnp.where(lane == 1, s1,
                         jnp.where(lane == 2, s2, 0.0)))
    return kernel


def spectral_distance_scale(x, y, n_fft, frame_tile=128, mxu_dtype=jnp.bfloat16):
    """Encodec-style STFT distance for one scale:
       mean((Sx-Sy)^2)/mean(Sx^2) + mean(|log1p(Sx)-log1p(Sy)|)."""
    assert n_fft % 4 == 0
    hop = n_fft // 4
    B, C, T = x.shape
    assert T >= n_fft
    RC = B * C
    num_frames = (T - n_fft) // hop + 1
    n_bins = n_fft // 2 + 1
    nbp = _round_up(n_bins, 128)                             # lane-padded bin count

    TF = min(frame_tile, _round_up(num_frames, 16))          # adapt tile to workload
    n_chunks = _cdiv(num_frames, TF)
    n_groups = 2 if (RC == 1 and n_chunks >= 2) else 1       # keep both v7x TCs busy
    cpg = _cdiv(n_chunks, n_groups)                          # chunks per group
    frames_pad = n_groups * cpg * TF

    # Materialize frames in the wrapper (kernel is compute-bound; extra HBM traffic
    # is irrelevant).  The Hann window is folded into the DFT basis.
    idx = jnp.arange(num_frames)[:, None] * hop + jnp.arange(n_fft)[None, :]
    fx = x.reshape(RC, T)[:, idx]                            # (RC, num_frames, n_fft)
    fy = y.reshape(RC, T)[:, idx]
    pad = ((0, 0), (0, frames_pad - num_frames), (0, 0))
    fx = jnp.pad(fx, pad).astype(mxu_dtype)                  # zero frames -> zero sums
    fy = jnp.pad(fy, pad).astype(mxu_dtype)

    basis = jnp.asarray(_fused_windowed_basis(n_fft, nbp), dtype=mxu_dtype)

    # VMEM budget: only raise the scoped limit when the default would not fit.
    basis_bytes = basis.size * basis.dtype.itemsize
    frame_blk_bytes = TF * n_fft * fx.dtype.itemsize
    scratch_bytes = 3 * TF * nbp * 4
    need = 2 * basis_bytes + 4 * frame_blk_bytes + scratch_bytes + (1 << 16)
    cp_kwargs = dict(dimension_semantics=("parallel", "parallel", "arbitrary"))
    if need > (16 << 20):
        cp_kwargs["vmem_limit_bytes"] = int(min(need * 5 // 4, 64 << 20))

    frame_spec = pl.BlockSpec((None, TF, n_fft), lambda r, g, c: (r, g * cpg + c, 0))
    out = pl.pallas_call(
        _make_spectral_kernel(nbp, cpg),
        out_shape=jax.ShapeDtypeStruct((RC, n_groups, 1, 128), jnp.float32),
        grid=(RC, n_groups, cpg),
        in_specs=[
            frame_spec,
            frame_spec,
            pl.BlockSpec((n_fft, 2 * nbp), lambda r, g, c: (0, 0)),  # constant basis
        ],
        out_specs=pl.BlockSpec((None, None, 1, 128), lambda r, g, c: (r, g, 0, 0)),
        scratch_shapes=[pltpu.VMEM((TF, nbp), jnp.float32)] * 3,
        compiler_params=pltpu.CompilerParams(**cp_kwargs),
    )(fx, fy, basis)

    sums = jnp.sum(out, axis=(0, 1, 2))                      # (128,) lane partials
    lin = sums[0] / sums[1]                                  # sum(diff^2)/sum(Sx^2)
    log = sums[2] / jnp.float32(RC * num_frames * n_bins)    # L1 on log1p magnitudes
    return lin + log


# ----------------------------------------------------------------------------
# EncodecAudioDistance equivalent
# ----------------------------------------------------------------------------
class EncodecAudioDistancePallas:
    def __init__(self, scales):
        self.scales = list(scales)

    def __call__(self, x, y):
        wf = waveform_distance(x, y)                         # mean_difference(y, x, 'L1')
        sd = jnp.float32(0.0)
        for s in self.scales:
            sd = sd + spectral_distance_scale(x, y, s)
        return {"waveform_distance": wf, "spectral_distance": sd}


# ----------------------------------------------------------------------------
# Pure-JAX reference (same math, f32 HIGHEST precision) for a correctness check
# ----------------------------------------------------------------------------
def _reference(x, y, scales):
    wf = jnp.mean(jnp.abs(y - x))
    B, C, T = x.shape
    sd = jnp.float32(0.0)
    hp = jax.lax.Precision.HIGHEST
    for n_fft in scales:
        hop = n_fft // 4
        num_frames = (T - n_fft) // hop + 1
        n_bins = n_fft // 2 + 1
        n = np.arange(n_fft)
        k = np.arange(n_bins)
        ang = 2.0 * np.pi * np.outer(n, k) / n_fft
        win = jnp.asarray(0.5 - 0.5 * np.cos(2.0 * np.pi * n / n_fft), jnp.float32)
        cosm = jnp.asarray(np.cos(ang), jnp.float32)
        sinm = jnp.asarray(np.sin(ang), jnp.float32)
        idx = jnp.arange(num_frames)[:, None] * hop + jnp.arange(n_fft)[None, :]
        fx = (x.reshape(B * C, T)[:, idx] * win).reshape(-1, n_fft)
        fy = (y.reshape(B * C, T)[:, idx] * win).reshape(-1, n_fft)
        sx = jnp.sqrt(jnp.dot(fx, cosm, precision=hp) ** 2 +
                      jnp.dot(fx, sinm, precision=hp) ** 2)
        sy = jnp.sqrt(jnp.dot(fy, cosm, precision=hp) ** 2 +
                      jnp.dot(fy, sinm, precision=hp) ** 2)
        lin = jnp.mean((sx - sy) ** 2) / jnp.mean(sx ** 2)
        log = jnp.mean(jnp.abs(jnp.log1p(sx) - jnp.log1p(sy)))
        sd = sd + lin + log
    return {"waveform_distance": wf, "spectral_distance": sd}


if __name__ == "__main__":
    key = jax.random.PRNGKey(0)
    kx, ky = jax.random.split(key)
    B, C, T = 2, 1, 1024                  # (batch, channels, time) like PyTorch audio
    scales = [64, 128]
    x = 0.1 * jax.random.normal(kx, (B, C, T), dtype=jnp.float32)
    y = 0.1 * jax.random.normal(ky, (B, C, T), dtype=jnp.float32)

    dist = EncodecAudioDistancePallas(scales)
    out = dist(x, y)
    out = jax.tree_util.tree_map(jax.block_until_ready, out)

    ref = _reference(x, y, scales)
    np.testing.assert_allclose(np.asarray(out["waveform_distance"]),
                               np.asarray(ref["waveform_distance"]),
                               rtol=1e-4, atol=1e-6)
    # Spectral path uses bf16 MXU operands with f32 accumulation -> slightly looser rtol.
    np.testing.assert_allclose(np.asarray(out["spectral_distance"]),
                               np.asarray(ref["spectral_distance"]),
                               rtol=5e-3, atol=1e-5)
    print("KERNEL_OK")
</pallas_src>

<mosaic_0001>
module attributes {stable_mosaic.version = 11 : i64} {
  func.func @kernel(%arg0: i32, %arg1: memref<2x1024xf32, #tpu.memory_space<vmem>>, %arg2: memref<2x1024xf32, #tpu.memory_space<vmem>>, %arg3: memref<1x1024xf32, #tpu.memory_space<vmem>>) attributes {dimension_semantics = [#tpu.dimension_semantics<parallel>], iteration_bounds = array<i64: 1>, scalar_prefetch = 0 : i64, scratch_operands = 0 : i64, tpu.core_type = #tpu.core_type<tc>, window_params = [{transform_indices = @transform_0, window_bounds = array<i64: 2, 1024>}, {transform_indices = @transform_1, window_bounds = array<i64: 2, 1024>}, {transform_indices = @transform_2, window_bounds = array<i64: 1, 1024>}]} {
    %c0 = arith.constant 0 : index
    %c0_0 = arith.constant 0 : index
    %0 = vector.load %arg2[%c0, %c0_0] : memref<2x1024xf32, #tpu.memory_space<vmem>>, vector<2x1024xf32>
    %c0_1 = arith.constant 0 : index
    %c0_2 = arith.constant 0 : index
    %1 = vector.load %arg1[%c0_1, %c0_2] : memref<2x1024xf32, #tpu.memory_space<vmem>>, vector<2x1024xf32>
    %2 = arith.subf %0, %1 : vector<2x1024xf32>
    %3 = math.absf %2 : vector<2x1024xf32>
    %cst = arith.constant dense<0.000000e+00> : vector<1024xf32>
    %4 = vector.multi_reduction <add>, %3, %cst [0] : vector<2x1024xf32> to vector<1024xf32>
    %5 = vector.shape_cast %4 : vector<1024xf32> to vector<1x1024xf32>
    %c0_3 = arith.constant 0 : index
    %c0_4 = arith.constant 0 : index
    %6 = vector.load %arg3[%c0_3, %c0_4] : memref<1x1024xf32, #tpu.memory_space<vmem>>, vector<1x1024xf32>
    tpu.vector_store %arg3[%c0_3, %c0_4], %5 {strides = array<i32>} : memref<1x1024xf32, #tpu.memory_space<vmem>>, vector<1x1024xf32>,
    return
  }
  func.func @transform_0(%arg0: i32) -> (i32, i32) {
    %c0_i32 = arith.constant 0 : i32
    %c0_i32_0 = arith.constant 0 : i32
    return %c0_i32, %arg0 : i32, i32
  }
  func.func @transform_1(%arg0: i32) -> (i32, i32) {
    %c0_i32 = arith.constant 0 : i32
    %c0_i32_0 = arith.constant 0 : i32
    return %c0_i32, %arg0 : i32, i32
  }
  func.func @transform_2(%arg0: i32) -> (i32, i32) {
    %c0_i32 = arith.constant 0 : i32
    %c0_i32_0 = arith.constant 0 : i32
    return %c0_i32, %arg0 : i32, i32
  }
}

</mosaic_0001>

<llo_original>
// kernel: tpu_custom_call.1
$region0: #{tpu_custom_call.1}
  #allocation0 [shape = 'u32[]', space=smem, size = 0x4, offset = 0x4, fixed_abs, tag = 'smem constant byte address 0x4 - core index']
  #allocation1 [shape = 'u32[72,128]{1,0:T(1,128)}', space=vmem, size = 0x9000, scoped, tag = 'internal scratch']
  %s0 = inlined_call_operand.hbm [shape: f32[2,1024], index: 0, kind: input, shape index: {}]
  %s1 = inlined_call_operand.hbm [shape: f32[2,1024], index: 1, kind: input, shape index: {}]
  %s2 = inlined_call_operand.hbm [shape: f32[1,1024], index: 2, kind: output, shape index: {}]
  %s3 = sld [smem:[#allocation0]]
  $region26: #{tpu_custom_call.1} parent=0
    _
  %s5 = ssub.s32 1, %s3
  %s6 = scalar_select 0, %s5, %s3
  $region1: #{tpu_custom_call.1} parent=0
    #allocation2 [shape = 'u8[8192]{0}', space=vmem, size = 0x2000, scoped, tag = 'input window, operand 0, single buffered']
    #allocation3 [shape = 's32[1]{0}', space=sflag, size = 0x4, scoped, tag = 'scoped memory for tpu_custom_call.1']
    #allocation4 [shape = 's32[1]{0}', space=sflag, size = 0x4, scoped, tag = 'scoped memory for tpu_custom_call.1']
    #allocation5 [shape = 'u8[8192]{0}', space=vmem, size = 0x2000, scoped, tag = 'input window, operand 1, single buffered']
    #allocation6 [shape = 's32[1]{0}', space=sflag, size = 0x4, scoped, tag = 'scoped memory for tpu_custom_call.1']
    #allocation7 [shape = 'u8[4096]{0}', space=vmem, size = 0x1000, scoped, tag = 'output window, operand 0, single buffered']
    %7 = vsyncpa [#allocation3], 0
    %8 = vsyncpa [#allocation6], 0
    %9 = vsyncpa [#allocation4], 0
    // Predicated region
    $region2: #{tpu_custom_call.1} parent=1 // pred_check
      _
    $region3: #{tpu_custom_call.1} parent=1 // pred_check_branch
      %11 = sbr.rel (0) target = $region5
    $region4: #{tpu_custom_call.1} parent=1 // pred_region
      %13 = vsyncadd [#allocation3], 0
      %s15 = sshll.u32 %s0, 4
      %s16 = int_to_ptr.hbm [resolvable:$true] %s15
      %s17 = sshll.u32 [#allocation2], 4
      %s18 = int_to_ptr.vmem [resolvable:$true] %s17
      %20 = dma.hbm_to_vmem [thread:$0]  %s16, 256, %s18, [#allocation3]
    $region5: #{tpu_custom_call.1} parent=1 // pred_fallthru
      _
    // Predicated region
    $region6: #{tpu_custom_call.1} parent=1 // pred_check
      _
    $region7: #{tpu_custom_call.1} parent=1 // pred_check_branch
      %22 = sbr.rel (0) target = $region9
    $region8: #{tpu_custom_call.1} parent=1 // pred_region
      %24 = vsyncadd [#allocation6], 0
      %s26 = sshll.u32 %s1, 4
      %s27 = int_to_ptr.hbm [resolvable:$true] %s26
      %s28 = sshll.u32 [#allocation5], 4
      %s29 = int_to_ptr.vmem [resolvable:$true] %s28
      %31 = dma.hbm_to_vmem [thread:$0]  %s27, 256, %s29, [#allocation6]
    $region9: #{tpu_custom_call.1} parent=1 // pred_fallthru
      _
    // Predicated region
    $region10: #{tpu_custom_call.1} parent=1 // pred_check
      _
    $region11: #{tpu_custom_call.1} parent=1 // pred_check_branch
      %33 = sbr.rel (0) target = $region13
    $region12: #{tpu_custom_call.1} parent=1 // pred_region
      %35 = dma.done [#allocation3], 256
    $region13: #{tpu_custom_call.1} parent=1 // pred_fallthru
      _
    // Predicated region
    $region14: #{tpu_custom_call.1} parent=1 // pred_check
      _
    $region15: #{tpu_custom_call.1} parent=1 // pred_check_branch
      %37 = sbr.rel (0) target = $region17
    $region16: #{tpu_custom_call.1} parent=1 // pred_region
      %39 = dma.done [#allocation6], 256
    $region17: #{tpu_custom_call.1} parent=1 // pred_fallthru
      _
    %v40 = vld [vmem:[#allocation5] sm:$0xff]
    %v41 = vld [vmem:[#allocation5 + $0x8] sm:$0xff]
    %v42 = vld [vmem:[#allocation2] sm:$0xff]
    %v43 = vld [vmem:[#allocation2 + $0x8] sm:$0xff]
    %v44 = vsub.f32 %v40, %v42
    %v45 = vsub.f32 %v41, %v43
    %v46 = vand.u32 2147483647, %v44
    %v47 = vand.u32 2147483647, %v45
    %50 = vst [vmem:[#allocation1] ss:$4 sm:$0xff] %v46
    %s51 = scalar_lea.vmem [#allocation1], 32
    %52 = vst [vmem:[%s51] ss:$4 sm:$0xff] %v47
    %v53 = vld.sshfl [vmem:[#allocation1] sm:$0xff pattern:$0x73625140]
    %v54 = vld.sshfl [vmem:[#allocation1 + $0x8] sm:$0xff pattern:$0x73625140]
    %v55 = vld.sshfl [vmem:[#allocation1 + $0x10] sm:$0xff pattern:$0x73625140]
    %v56 = vld.sshfl [vmem:[#allocation1 + $0x18] sm:$0xff pattern:$0x73625140]
    %v57 = vld.sshfl [vmem:[#allocation1 + $0x20] sm:$0xff pattern:$0x73625140]
    %v58 = vld.sshfl [vmem:[#allocation1 + $0x28] sm:$0xff pattern:$0x73625140]
    %v59 = vld.sshfl [vmem:[#allocation1 + $0x30] sm:$0xff pattern:$0x73625140]
    %v60 = vld.sshfl [vmem:[#allocation1 + $0x38] sm:$0xff pattern:$0x73625140]
    %vm69 = vcmask 1041408
    %v70 = vsel %vm69, %v53, 0.0
    %v71 = vrot.slane %v70, 4
    %v72 = vadd.f32 %v70, %v71
    %v73 = vrot.slane %v72, 2
    %v74 = vadd.f32 %v72, %v73
    %v75 = vrot.slane %v74, 1
    %v76 = vadd.f32 %v74, %v75
    %v77 = vsel %vm69, %v54, 0.0
    %v78 = vrot.slane %v77, 4
    %v79 = vadd.f32 %v77, %v78
    %v80 = vrot.slane %v79, 2
    %v81 = vadd.f32 %v79, %v80
    %v82 = vrot.slane %v81, 1
    %v83 = vadd.f32 %v81, %v82
    %v84 = vsel %vm69, %v55, 0.0
    %v85 = vrot.slane %v84, 4
    %v86 = vadd.f32 %v84, %v85
    %v87 = vrot.slane %v86, 2
    %v88 = vadd.f32 %v86, %v87
    %v89 = vrot.slane %v88, 1
    %v90 = vadd.f32 %v88, %v89
    %v91 = vsel %vm69, %v56, 0.0
    %v92 = vrot.slane %v91, 4
    %v93 = vadd.f32 %v91, %v92
    %v94 = vrot.slane %v93, 2
    %v95 = vadd.f32 %v93, %v94
    %v96 = vrot.slane %v95, 1
    %v97 = vadd.f32 %v95, %v96
    %v98 = vsel %vm69, %v57, 0.0
    %v99 = vrot.slane %v98, 4
    %v100 = vadd.f32 %v98, %v99
    %v101 = vrot.slane %v100, 2
    %v102 = vadd.f32 %v100, %v101
    %v103 = vrot.slane %v102, 1
    %v104 = vadd.f32 %v102, %v103
    %v105 = vsel %vm69, %v58, 0.0
    %v106 = vrot.slane %v105, 4
    %v107 = vadd.f32 %v105, %v106
    %v108 = vrot.slane %v107, 2
    %v109 = vadd.f32 %v107, %v108
    %v110 = vrot.slane %v109, 1
    %v111 = vadd.f32 %v109, %v110
    %v112 = vsel %vm69, %v59, 0.0
    %v113 = vrot.slane %v112, 4
    %v114 = vadd.f32 %v112, %v113
    %v115 = vrot.slane %v114, 2
    %v116 = vadd.f32 %v114, %v115
    %v117 = vrot.slane %v116, 1
    %v118 = vadd.f32 %v116, %v117
    %v119 = vsel %vm69, %v60, 0.0
    %v120 = vrot.slane %v119, 4
    %v121 = vadd.f32 %v119, %v120
    %v122 = vrot.slane %v121, 2
    %v123 = vadd.f32 %v121, %v122
    %v124 = vrot.slane %v123, 1
    %v125 = vadd.f32 %v123, %v124
    %v134 = vrot.slane %v83, 7
    %v135 = vrot.slane %v90, 6
    %v136 = vrot.slane %v97, 5
    %v137 = vrot.slane %v104, 4
    %v138 = vrot.slane %v111, 3
    %v139 = vrot.slane %v118, 2
    %v140 = vrot.slane %v125, 1
    %vm141 = vcmask 1040384
    %v142 = vsel %vm141, %v76, %v134
    %vm143 = vcmask 1042434
    %v144 = vsel %vm143, %v135, %v136
    %v145 = vsel %vm69, %v142, %v144
    %vm146 = vcmask 1044484
    %v147 = vsel %vm146, %v137, %v138
    %vm148 = vcmask 1046534
    %v149 = vsel %vm148, %v139, %v140
    %vm150 = vcmask 1045508
    %v151 = vsel %vm150, %v147, %v149
    %vm152 = vcmask 1043456
    %v153 = vsel %vm152, %v145, %v151
    %155 = vst [vmem:[#allocation7] sm:$0xff] %v153
    // Predicated region
    $region18: #{tpu_custom_call.1} parent=1 // pred_check
      _
    $region19: #{tpu_custom_call.1} parent=1 // pred_check_branch
      %157 = sbr.rel (0) target = $region21
    $region20: #{tpu_custom_call.1} parent=1 // pred_region
      %159 = vsyncadd [#allocation4], 0
      %s161 = sshll.u32 [#allocation7], 4
      %s162 = int_to_ptr.vmem [resolvable:$true] %s161
      %s163 = sshll.u32 %s2, 4
      %s164 = int_to_ptr.hbm [resolvable:$true] %s163
      %166 = dma.vmem_to_hbm [thread:$0]  %s162, 128, %s164, [#allocation4]
    $region21: #{tpu_custom_call.1} parent=1 // pred_fallthru
      _
    // Predicated region
    $region22: #{tpu_custom_call.1} parent=1 // pred_check
      _
    $region23: #{tpu_custom_call.1} parent=1 // pred_check_branch
      %168 = sbr.rel (0) target = $region25
    $region24: #{tpu_custom_call.1} parent=1 // pred_region
      %170 = dma.done [#allocation4], 128
    $region25: #{tpu_custom_call.1} parent=1 // pred_fallthru
      _
    %171 = vsyncpa [#allocation3], 1
    %172 = vsyncpa [#allocation6], 1
    %173 = vsyncpa [#allocation4], 1

</llo_original>
